<compile_context>
chip_gen: v5e
topology: v5e:2x2
jax: 0.10.0
libtpu: 0.0.40
codegen_flags: <defaults>
</compile_context>

<pallas_src>
import jax
import jax.numpy as jnp
from jax.experimental import pallas as pl
from jax.experimental.pallas import tpu as pltpu


def _round_up(x, m):
    return (x + m - 1) // m * m


def _round_down(x, m):
    return x // m * m


def memory_gate_kernel(x_ref, mem_ref, w_ref, b_ref, out_ref):
    # logits = mem @ W_t  (bf16 MXU operands, f32 accumulate).  W_t is already laid
    # out (in, out) by the wrapper, so this is a plain row-major contraction (no
    # per-step transpose work).
    logits = jnp.dot(mem_ref[...].astype(jnp.bfloat16), w_ref[...],
                     preferred_element_type=jnp.float32)
    z = logits + b_ref[...]                                   # (TM,TN) + (1,TN), f32
    # sigmoid(z) = 1 / (1 + exp(-z)); exp and approx reciprocal both run on the EUP
    # slot, keeping the VPU free.  Kept in f32 (no bf16 EUP on v5e).
    gate = pl.reciprocal(1.0 + jnp.exp(-z), approx=True)
    out_ref[...] = (x_ref[...].astype(jnp.float32) * gate).astype(out_ref.dtype)


def _vmem_budget_bytes():
    """Per-TensorCore VMEM budget, generation-aware."""
    cap = 64 * 1024 * 1024                                    # conservative fallback
    try:
        info = pltpu.get_tpu_info()
        cap = int(getattr(info, "vmem_capacity_bytes", cap)) or cap
    except Exception:
        pass
    # ~105 MiB on 128 MiB parts (v5e/v6e), ~48 MiB on 64 MiB parts (v7x).
    return min(cap - 16 * 1024 * 1024, int(0.82 * cap))


def memory_gate_layer(x, memory_output, weight, bias, *,
                      block_rows=None, block_cols=None, weight_resident=None):
    """
    x, memory_output : [batch, seq, hidden]
    weight           : [hidden, hidden]   (PyTorch nn.Linear .weight, i.e. out x in)
    bias             : [hidden]
    returns          : [batch, seq, hidden]
    """
    B, S, H = x.shape
    M = B * S
    itemsize = jnp.dtype(x.dtype).itemsize
    w_itemsize = 2                                            # weight carried as bf16

    # Lane-dense layout: pad hidden only when it is not already a lane multiple
    # (no-op for typical hidden sizes).  Rows are never padded.
    H_pad = _round_up(H, 128)

    x2 = x.reshape(M, H)
    m2 = memory_output.reshape(M, H)
    # One-time wrapper transpose + bf16 cast (single fused XLA pass over the weight).
    w2 = weight.T.astype(jnp.bfloat16)
    b2 = bias.astype(jnp.float32).reshape(1, H)
    if H_pad != H:
        x2 = jnp.pad(x2, ((0, 0), (0, H_pad - H)))
        m2 = jnp.pad(m2, ((0, 0), (0, H_pad - H)))
        w2 = jnp.pad(w2, ((0, H_pad - H), (0, H_pad - H)))
        b2 = jnp.pad(b2, ((0, 0), (0, H_pad - H)))

    budget = _vmem_budget_bytes()
    weight_bytes = H_pad * H_pad * w_itemsize                 # single-buffered resident
    # Streamed per-row bytes: x / mem / out blocks double-buffered, plus in-kernel
    # temporaries (bf16 copy of the mem tile, f32 logits/gate).
    per_row_bytes = 3 * 2 * H_pad * itemsize + H_pad * (2 + 4)

    if weight_resident is None:
        weight_resident = (weight_bytes + 64 * per_row_bytes + (1 << 20)) <= budget

    # Allow larger row tiles when the hidden dim is small so each streamed block is a
    # few MiB (amortizes ~0.35us per-grid-step overhead, better DMA efficiency).
    row_cap = max(1024, min(4096,
                  _round_down((4 * 1024 * 1024) // (H_pad * itemsize), 8)))

    if weight_resident:
        # --- 1-D grid over rows; weight + bias fully VMEM-resident (1 buffer). ---
        avail = budget - weight_bytes - (1 << 20)
        tm = _round_down(max(avail, per_row_bytes * 8) // per_row_bytes, 8)
        tm = int(max(8, min(tm, row_cap, _round_up(M, 8))))
        if block_rows is not None:
            tm = int(block_rows)

        grid = (pl.cdiv(M, tm),)                              # ragged last block is masked
        in_specs = [
            pl.BlockSpec((tm, H_pad), lambda i: (i, 0)),          # x rows      (streamed)
            pl.BlockSpec((tm, H_pad), lambda i: (i, 0)),          # memory rows (streamed)
            pl.BlockSpec(memory_space=pltpu.MemorySpace.VMEM),    # weight (resident, 1-buf)
            pl.BlockSpec(memory_space=pltpu.MemorySpace.VMEM),    # bias   (resident, 1-buf)
        ]
        out_specs = pl.BlockSpec((tm, H_pad), lambda i: (i, 0))
        dim_sem = ("parallel",)
        vmem_needed = weight_bytes + 4 * H_pad + tm * per_row_bytes + (1 << 20)
    else:
        # --- Large-H fallback: 2-D grid (n_tiles, row_tiles), weight out-axis tiled.
        # The column tile is the OUTER axis so each (H_pad, tn) weight slab stays in
        # VMEM for a whole sweep over the rows (total weight traffic ~H^2 bytes); the
        # memory rows are re-streamed n_tiles times instead.  Each step produces a
        # complete (tm, tn) output block, so no accumulator scratch is needed.
        tn = block_cols
        if tn is None:
            tn = _round_down(
                min(H_pad, max(128, (budget // 3) // (2 * H_pad * w_itemsize))), 128)
            tn = max(tn, 128)
        tn = int(tn)
        w_block_bytes = 2 * H_pad * tn * w_itemsize           # double-buffered slab
        per_row_tiled = (2 * H_pad * itemsize                 # mem block (dbuf)
                         + 2 * 2 * tn * itemsize              # x + out blocks (dbuf)
                         + H_pad * 2 + tn * 4)                # bf16 mem copy + f32 logits
        avail = budget - w_block_bytes - (1 << 20)
        tm = _round_down(max(avail, per_row_tiled * 8) // per_row_tiled, 8)
        tm = int(max(8, min(tm, row_cap, _round_up(M, 8))))
        if block_rows is not None:
            tm = int(block_rows)

        grid = (pl.cdiv(H_pad, tn), pl.cdiv(M, tm))
        in_specs = [
            pl.BlockSpec((tm, tn), lambda j, i: (i, j)),       # x columns of this n-tile
            pl.BlockSpec((tm, H_pad), lambda j, i: (i, 0)),    # memory rows (full K)
            pl.BlockSpec((H_pad, tn), lambda j, i: (0, j)),    # weight column slab
            pl.BlockSpec((1, tn), lambda j, i: (0, j)),        # bias slice
        ]
        out_specs = pl.BlockSpec((tm, tn), lambda j, i: (i, j))
        dim_sem = ("parallel", "parallel")
        vmem_needed = w_block_bytes + tm * per_row_tiled + 4 * tn + (1 << 20)

    # Never clamp the limit below what is actually needed.
    vmem_limit = int(max(16 * 1024 * 1024, vmem_needed + (2 << 20)))

    cost = pl.CostEstimate(
        flops=2 * M * H_pad * H_pad,
        transcendentals=M * H_pad,
        bytes_accessed=(3 * M * H_pad * itemsize
                        + H_pad * H_pad * w_itemsize
                        + H_pad * 4),
    )

    out2 = pl.pallas_call(
        memory_gate_kernel,
        out_shape=jax.ShapeDtypeStruct((M, H_pad), x.dtype),
        grid=grid,
        in_specs=in_specs,
        out_specs=out_specs,
        compiler_params=pltpu.CompilerParams(
            dimension_semantics=dim_sem,                      # megacore sharding
            vmem_limit_bytes=vmem_limit,
        ),
        cost_estimate=cost,
    )(x2, m2, w2, b2)

    if H_pad != H:
        out2 = out2[:, :H]
    return out2.reshape(B, S, H)


if __name__ == "__main__":
    key = jax.random.PRNGKey(0)
    kx, km, kw, kb = jax.random.split(key, 4)

    def ref_fn(x, mem, w, b):
        return x * jax.nn.sigmoid(jnp.einsum("bsh,oh->bso", mem, w) + b)

    # --- Main demo: batch=2, seq=8, hidden=32 (auto path: resident weight). ---
    B, S, H = 2, 8, 32
    x = jax.random.normal(kx, (B, S, H), dtype=jnp.float32)
    mem = jax.random.normal(km, (B, S, H), dtype=jnp.float32)
    bound = 1.0 / (H ** 0.5)
    w = jax.random.uniform(kw, (H, H), jnp.float32, -bound, bound)
    b = jax.random.uniform(kb, (H,), jnp.float32, -bound, bound)

    out = memory_gate_layer(x, mem, w, b)
    jax.block_until_ready(out)
    ref = ref_fn(x, mem, w, b)
    assert out.shape == ref.shape, "shape mismatch vs reference"
    # bf16 MXU operands -> loosened tolerance vs the f32 reference.
    assert jnp.allclose(out, ref, atol=2e-2, rtol=2e-2), "mismatch (resident path)"

    # --- Ragged last row block (M = 18 not a multiple of the 8-row tile). ---
    x_r = jax.random.normal(kx, (2, 9, H), dtype=jnp.float32)
    mem_r = jax.random.normal(km, (2, 9, H), dtype=jnp.float32)
    out_r = memory_gate_layer(x_r, mem_r, w, b, block_rows=8)
    jax.block_until_ready(out_r)
    assert jnp.allclose(out_r, ref_fn(x_r, mem_r, w, b), atol=2e-2, rtol=2e-2), \
        "mismatch (ragged rows)"

    # --- Large-H fallback path (weight out-axis tiled), forced at a small size. ---
    H3 = 256
    kx3, km3, kw3, kb3 = jax.random.split(jax.random.PRNGKey(0), 4)
    x3 = jax.random.normal(kx3, (2, 8, H3), dtype=jnp.float32)
    mem3 = jax.random.normal(km3, (2, 8, H3), dtype=jnp.float32)
    bound3 = 1.0 / (H3 ** 0.5)
    w3 = jax.random.uniform(kw3, (H3, H3), jnp.float32, -bound3, bound3)
    b3 = jax.random.uniform(kb3, (H3,), jnp.float32, -bound3, bound3)
    out3 = memory_gate_layer(x3, mem3, w3, b3,
                             weight_resident=False, block_rows=8, block_cols=128)
    jax.block_until_ready(out3)
    assert jnp.allclose(out3, ref_fn(x3, mem3, w3, b3), atol=2e-2, rtol=2e-2), \
        "mismatch (tiled-weight path)"

    print("KERNEL_OK")
</pallas_src>

<mosaic_0001>
module attributes {stable_mosaic.version = 11 : i64} {
  func.func @memory_gate_kernel(%arg0: i32, %arg1: memref<16x128xf32, #tpu.memory_space<vmem>>, %arg2: memref<16x128xf32, #tpu.memory_space<vmem>>, %arg3: memref<128x128xbf16, #tpu.memory_space<vmem>>, %arg4: memref<1x128xf32, #tpu.memory_space<vmem>>, %arg5: memref<16x128xf32, #tpu.memory_space<vmem>>) attributes {dimension_semantics = [#tpu.dimension_semantics<parallel>], iteration_bounds = array<i64: 1>, scalar_prefetch = 0 : i64, scratch_operands = 0 : i64, tpu.core_type = #tpu.core_type<tc>, window_params = [{transform_indices = @transform_0, window_bounds = array<i64: 16, 128>}, {transform_indices = @transform_1, window_bounds = array<i64: 16, 128>}, {pipeline_mode = #tpu.pipeline_mode<synchronous>, transform_indices = @transform_2, window_bounds = array<i64: 128, 128>}, {pipeline_mode = #tpu.pipeline_mode<synchronous>, transform_indices = @transform_3, window_bounds = array<i64: 1, 128>}, {transform_indices = @transform_4, window_bounds = array<i64: 16, 128>}]} {
    %c0 = arith.constant 0 : index
    %c0_0 = arith.constant 0 : index
    %0 = vector.load %arg2[%c0, %c0_0] : memref<16x128xf32, #tpu.memory_space<vmem>>, vector<16x128xf32>
    %1 = arith.truncf %0 : vector<16x128xf32> to vector<16x128xbf16>
    %c0_1 = arith.constant 0 : index
    %c0_2 = arith.constant 0 : index
    %2 = vector.load %arg3[%c0_1, %c0_2] : memref<128x128xbf16, #tpu.memory_space<vmem>>, vector<128x128xbf16>
    %cst = arith.constant dense<0.000000e+00> : vector<16x128xf32>
    %3 = tpu.matmul %1, %2, %cst {dimension_numbers = #tpu.dot_dimension_numbers<[1], [0], [0], [1], [0, 0, 1, 1], [], []>} : vector<16x128xbf16>, vector<128x128xbf16>, vector<16x128xf32> -> vector<16x128xf32>
    %c0_3 = arith.constant 0 : index
    %c0_4 = arith.constant 0 : index
    %4 = vector.load %arg4[%c0_3, %c0_4] : memref<1x128xf32, #tpu.memory_space<vmem>>, vector<1x128xf32>
    %5 = vector.broadcast %4 : vector<1x128xf32> to vector<16x128xf32>
    %6 = arith.addf %3, %5 : vector<16x128xf32>
    %cst_5 = arith.constant 0.000000e+00 : f32
    %7 = vector.broadcast %cst_5 : f32 to vector<16x128xf32>
    %8 = arith.subf %7, %6 : vector<16x128xf32>
    %9 = math.exp %8 : vector<16x128xf32>
    %cst_6 = arith.constant 1.000000e+00 : f32
    %10 = vector.broadcast %cst_6 : f32 to vector<16x128xf32>
    %11 = arith.addf %10, %9 : vector<16x128xf32>
    %12 = tpu.reciprocal %11 {approx = true} : vector<16x128xf32> -> vector<16x128xf32>
    %c0_7 = arith.constant 0 : index
    %c0_8 = arith.constant 0 : index
    %13 = vector.load %arg1[%c0_7, %c0_8] : memref<16x128xf32, #tpu.memory_space<vmem>>, vector<16x128xf32>
    %14 = arith.mulf %13, %12 : vector<16x128xf32>
    %c0_9 = arith.constant 0 : index
    %c0_10 = arith.constant 0 : index
    %15 = vector.load %arg5[%c0_9, %c0_10] : memref<16x128xf32, #tpu.memory_space<vmem>>, vector<16x128xf32>
    tpu.vector_store %arg5[%c0_9, %c0_10], %14 {strides = array<i32>} : memref<16x128xf32, #tpu.memory_space<vmem>>, vector<16x128xf32>,
    return
  }
  func.func @transform_0(%arg0: i32) -> (i32, i32) {
    %c0_i32 = arith.constant 0 : i32
    %c0_i32_0 = arith.constant 0 : i32
    return %arg0, %c0_i32 : i32, i32
  }
  func.func @transform_1(%arg0: i32) -> (i32, i32) {
    %c0_i32 = arith.constant 0 : i32
    %c0_i32_0 = arith.constant 0 : i32
    return %arg0, %c0_i32 : i32, i32
  }
  func.func @transform_2(%arg0: i32) -> (i32, i32) {
    %c0_i32 = arith.constant 0 : i32
    %c0_i32_0 = arith.constant 0 : i32
    %c0_i32_1 = arith.constant 0 : i32
    return %c0_i32, %c0_i32_0 : i32, i32
  }
  func.func @transform_3(%arg0: i32) -> (i32, i32) {
    %c0_i32 = arith.constant 0 : i32
    %c0_i32_0 = arith.constant 0 : i32
    %c0_i32_1 = arith.constant 0 : i32
    return %c0_i32, %c0_i32_0 : i32, i32
  }
  func.func @transform_4(%arg0: i32) -> (i32, i32) {
    %c0_i32 = arith.constant 0 : i32
    %c0_i32_0 = arith.constant 0 : i32
    return %arg0, %c0_i32 : i32, i32
  }
}

</mosaic_0001>

<llo_original>
// kernel: tpu_custom_call.1
$region0: #{tpu_custom_call.1}
  #allocation0 [shape = 'u32[]', space=smem, size = 0x4, offset = 0x4, fixed_abs, tag = 'smem constant byte address 0x4 - core index']
  #allocation1 [shape = 'u32[72,128]{1,0:T(1,128)}', space=vmem, size = 0x9000, scoped, tag = 'internal scratch']
  %s0 = inlined_call_operand.hbm [shape: f32[16,128], index: 0, kind: input, shape index: {}]
  %s1 = inlined_call_operand.hbm [shape: f32[16,128], index: 1, kind: input, shape index: {}]
  %s2 = inlined_call_operand.hbm [shape: bf16[128,128], index: 2, kind: input, shape index: {}]
  %s3 = inlined_call_operand.vmem [shape: f32[1,128], index: 3, kind: input, shape index: {}]
  %s4 = inlined_call_operand.hbm [shape: f32[16,128], index: 4, kind: output, shape index: {}]
  %s5 = sld [smem:[#allocation0]]
  $region38: #{tpu_custom_call.1} parent=0
    _
  %s7 = ssub.s32 1, %s5
  %s8 = scalar_select 0, %s7, %s5
  $region1: #{tpu_custom_call.1} parent=0
    #allocation2 [shape = 'u8[8192]{0}', space=vmem, size = 0x2000, scoped, tag = 'input window, operand 0, single buffered']
    #allocation3 [shape = 's32[1]{0}', space=sflag, size = 0x4, scoped, tag = 'scoped memory for tpu_custom_call.1']
    #allocation4 [shape = 's32[1]{0}', space=sflag, size = 0x4, scoped, tag = 'scoped memory for tpu_custom_call.1']
    #allocation5 [shape = 'u8[8192]{0}', space=vmem, size = 0x2000, scoped, tag = 'input window, operand 1, single buffered']
    #allocation6 [shape = 's32[1]{0}', space=sflag, size = 0x4, scoped, tag = 'scoped memory for tpu_custom_call.1']
    #allocation7 [shape = 'u8[32768]{0}', space=vmem, size = 0x8000, scoped, tag = 'input window, operand 2, single buffered']
    #allocation8 [shape = 'u8[8192]{0}', space=vmem, size = 0x2000, scoped, tag = 'output window, operand 0, single buffered']
    %9 = vsyncpa [#allocation3], 0
    %10 = vsyncpa [#allocation6], 0
    %11 = vsyncpa [#allocation4], 0
    // Predicated region
    $region2: #{tpu_custom_call.1} parent=1 // pred_check
      _
    $region3: #{tpu_custom_call.1} parent=1 // pred_check_branch
      %13 = sbr.rel (0) target = $region5
    $region4: #{tpu_custom_call.1} parent=1 // pred_region
      %15 = vsyncadd [#allocation3], 0
      %s16 = sshll.u32 %s0, 4
      %s17 = int_to_ptr.hbm [resolvable:$true] %s16
      %s18 = sshll.u32 [#allocation2], 4
      %s19 = int_to_ptr.vmem [resolvable:$true] %s18
      %24 = dma.hbm_to_vmem [thread:$0]  %s17, 256, %s19, [#allocation3], 128, 128, 8
    $region5: #{tpu_custom_call.1} parent=1 // pred_fallthru
      _
    // Predicated region
    $region6: #{tpu_custom_call.1} parent=1 // pred_check
      _
    $region7: #{tpu_custom_call.1} parent=1 // pred_check_branch
      %26 = sbr.rel (0) target = $region9
    $region8: #{tpu_custom_call.1} parent=1 // pred_region
      %28 = vsyncadd [#allocation6], 0
      %s29 = sshll.u32 %s1, 4
      %s30 = int_to_ptr.hbm [resolvable:$true] %s29
      %s31 = sshll.u32 [#allocation5], 4
      %s32 = int_to_ptr.vmem [resolvable:$true] %s31
      %37 = dma.hbm_to_vmem [thread:$0]  %s30, 256, %s32, [#allocation6], 128, 128, 8
    $region9: #{tpu_custom_call.1} parent=1 // pred_fallthru
      _
    // Predicated region
    $region10: #{tpu_custom_call.1} parent=1 // pred_check
      _
    $region11: #{tpu_custom_call.1} parent=1 // pred_check_branch
      %39 = sbr.rel (0) target = $region13
    $region12: #{tpu_custom_call.1} parent=1 // pred_region
      %41 = vsyncadd [#allocation6], 0
      %s42 = sshll.u32 %s2, 4
      %s43 = int_to_ptr.hbm [resolvable:$true] %s42
      %s44 = sshll.u32 [#allocation7], 4
      %s45 = int_to_ptr.vmem [resolvable:$true] %s44
      %50 = dma.hbm_to_vmem [thread:$0]  %s43, 1024, %s45, [#allocation6], 64, 64, 4
    $region13: #{tpu_custom_call.1} parent=1 // pred_fallthru
      _
    // Predicated region
    $region14: #{tpu_custom_call.1} parent=1 // pred_check
      _
    $region15: #{tpu_custom_call.1} parent=1 // pred_check_branch
      %52 = sbr.rel (0) target = $region17
    $region16: #{tpu_custom_call.1} parent=1 // pred_region
      _
    $region17: #{tpu_custom_call.1} parent=1 // pred_fallthru
      _
    // Predicated region
    $region18: #{tpu_custom_call.1} parent=1 // pred_check
      _
    $region19: #{tpu_custom_call.1} parent=1 // pred_check_branch
      %54 = sbr.rel (0) target = $region21
    $region20: #{tpu_custom_call.1} parent=1 // pred_region
      %56 = dma.done [#allocation3], 256
    $region21: #{tpu_custom_call.1} parent=1 // pred_fallthru
      _
    // Predicated region
    $region22: #{tpu_custom_call.1} parent=1 // pred_check
      _
    $region23: #{tpu_custom_call.1} parent=1 // pred_check_branch
      %58 = sbr.rel (0) target = $region25
    $region24: #{tpu_custom_call.1} parent=1 // pred_region
      %60 = dma.done [#allocation6], 256
    $region25: #{tpu_custom_call.1} parent=1 // pred_fallthru
      _
    // Predicated region
    $region26: #{tpu_custom_call.1} parent=1 // pred_check
      _
    $region27: #{tpu_custom_call.1} parent=1 // pred_check_branch
      %62 = sbr.rel (0) target = $region29
    $region28: #{tpu_custom_call.1} parent=1 // pred_region
      %64 = dma.done [#allocation6], 1024
    $region29: #{tpu_custom_call.1} parent=1 // pred_fallthru
      _
    %v65 = vld [vmem:[#allocation5] sm:$0xff]
    %v66 = vld [vmem:[#allocation5 + $0x8] sm:$0xff]
    %v67 = vpack.c.bf16 %v66, %v65
    %v68 = vld [vmem:[#allocation7] sm:$0xf]
    %v69 = vld [vmem:[#allocation7 + $0x4] sm:$0xf]
    %v70 = vld [vmem:[#allocation7 + $0x8] sm:$0xf]
    %v71 = vld [vmem:[#allocation7 + $0xc] sm:$0xf]
    %v72 = vld [vmem:[#allocation7 + $0x10] sm:$0xf]
    %v73 = vld [vmem:[#allocation7 + $0x14] sm:$0xf]
    %v74 = vld [vmem:[#allocation7 + $0x18] sm:$0xf]
    %v75 = vld [vmem:[#allocation7 + $0x1c] sm:$0xf]
    %v76 = vld [vmem:[#allocation7 + $0x20] sm:$0xf]
    %v77 = vld [vmem:[#allocation7 + $0x24] sm:$0xf]
    %v78 = vld [vmem:[#allocation7 + $0x28] sm:$0xf]
    %v79 = vld [vmem:[#allocation7 + $0x2c] sm:$0xf]
    %v80 = vld [vmem:[#allocation7 + $0x30] sm:$0xf]
    %v81 = vld [vmem:[#allocation7 + $0x34] sm:$0xf]
    %v82 = vld [vmem:[#allocation7 + $0x38] sm:$0xf]
    %v83 = vld [vmem:[#allocation7 + $0x3c] sm:$0xf]
    %v84 = vld [vmem:[%s3] sm:$0x1]
    %v86 = vperm.slane %v84, 0
    %v104 = vunpack.c.l.b16 %v68
    %v105 = vunpack.c.l.b16 %v69
    %v106 = vunpack.c.l.b16 %v70
    %v107 = vunpack.c.l.b16 %v71
    %v108 = vunpack.c.l.b16 %v72
    %v109 = vunpack.c.l.b16 %v73
    %v110 = vunpack.c.l.b16 %v74
    %v111 = vunpack.c.l.b16 %v75
    %v112 = vunpack.c.l.b16 %v76
    %v113 = vunpack.c.l.b16 %v77
    %v114 = vunpack.c.l.b16 %v78
    %v115 = vunpack.c.l.b16 %v79
    %v116 = vunpack.c.l.b16 %v80
    %v117 = vunpack.c.l.b16 %v81
    %v118 = vunpack.c.l.b16 %v82
    %v119 = vunpack.c.l.b16 %v83
    %v120 = vpack.c.b16 %v105, %v104
    %v121 = vpack.c.b16 %v107, %v106
    %v122 = vpack.c.b16 %v109, %v108
    %v123 = vpack.c.b16 %v111, %v110
    %v124 = vpack.c.b16 %v113, %v112
    %v125 = vpack.c.b16 %v115, %v114
    %v126 = vpack.c.b16 %v117, %v116
    %v127 = vpack.c.b16 %v119, %v118
    %136 = vmatpush.bf16.msra.mxu0 %v127
    %137 = vmatpush.bf16.msra.mxu0 %v126
    %138 = vmatpush.bf16.msra.mxu0 %v125
    %139 = vmatpush.bf16.msra.mxu0 %v124
    %140 = vmatpush.bf16.msra.mxu0 %v123
    %141 = vmatpush.bf16.msra.mxu0 %v122
    %142 = vmatpush.bf16.msra.mxu0 %v121
    %143 = vmatpush.bf16.msra.mxu0 %v120
    %144 = vmatmul.bf16.gmra.mxu0 %v67
    %v145 = vpop.f32.mrf.mxu0
    %v146 = vadd.f32 %v86, %v145
    %v147 = vpop.f32.mrf.mxu0
    %v148 = vadd.f32 %v86, %v147
    %149 = vdwg.mxu0
    %v150 = vsub.f32 0.0, %v146
    %v151 = vsub.f32 0.0, %v148
    %v152 = vmul.f32 %v150, 1.442695
    %v153 = vpow.pop %v152
    %v154 = vmul.f32 %v151, 1.442695
    %v155 = vpow.pop %v154
    %v156 = vadd.f32 %v153, 1.0
    %v157 = vadd.f32 %v155, 1.0
    %v158 = vrcp.pop %v156
    %v159 = vrcp.pop %v157
    %v160 = vld [vmem:[#allocation2] sm:$0xff]
    %v161 = vld [vmem:[#allocation2 + $0x8] sm:$0xff]
    %v162 = vmul.f32 %v160, %v158
    %v163 = vmul.f32 %v161, %v159
    %164 = vst [vmem:[#allocation8] sm:$0xff] %v162
    %165 = vst [vmem:[#allocation8 + $0x8] sm:$0xff] %v163
    // Predicated region
    $region30: #{tpu_custom_call.1} parent=1 // pred_check
      _
    $region31: #{tpu_custom_call.1} parent=1 // pred_check_branch
      %167 = sbr.rel (0) target = $region33
    $region32: #{tpu_custom_call.1} parent=1 // pred_region
      %169 = vsyncadd [#allocation4], 0
      %s170 = sshll.u32 [#allocation8], 4
      %s171 = int_to_ptr.vmem [resolvable:$true] %s170
      %s172 = sshll.u32 %s4, 4
      %s173 = int_to_ptr.hbm [resolvable:$true] %s172
      %178 = dma.vmem_to_hbm [thread:$0]  %s171, 256, %s173, [#allocation4], 128, 128, 8
    $region33: #{tpu_custom_call.1} parent=1 // pred_fallthru
      _
    // Predicated region
    $region34: #{tpu_custom_call.1} parent=1 // pred_check
      _
    $region35: #{tpu_custom_call.1} parent=1 // pred_check_branch
      %180 = sbr.rel (0) target = $region37
    $region36: #{tpu_custom_call.1} parent=1 // pred_region
      %182 = dma.done [#allocation4], 256
    $region37: #{tpu_custom_call.1} parent=1 // pred_fallthru
      _
    %183 = vsyncpa [#allocation3], 1
    %184 = vsyncpa [#allocation6], 1
    %185 = vsyncpa [#allocation4], 1

</llo_original>
